<compile_context>
chip_gen: v5e
topology: v5e:2x2
jax: 0.10.0
libtpu: 0.0.40
codegen_flags: <defaults>
</compile_context>

<pallas_src>
import functools

import jax
import jax.numpy as jnp
from jax.experimental import pallas as pl
from jax.experimental.pallas import tpu as pltpu


# ---------------------------------------------------------------------------
# Kernels
# ---------------------------------------------------------------------------
def _fullk_kernel(x_ref, w1_ref, w2_ref, b1_ref, b2_ref, o_ref, *, compute_dtype):
    """Single-K grid step: both half-matmuls + bias + SliceMax, no scratch."""
    x = x_ref[...]
    w1 = w1_ref[...]
    w2 = w2_ref[...]
    if compute_dtype is not None:
        x = x.astype(compute_dtype)
        w1 = w1.astype(compute_dtype)
        w2 = w2.astype(compute_dtype)
    y1 = jnp.dot(x, w1, preferred_element_type=jnp.float32)
    y2 = jnp.dot(x, w2, preferred_element_type=jnp.float32)
    y1 = y1 + b1_ref[...].astype(jnp.float32)
    y2 = y2 + b2_ref[...].astype(jnp.float32)
    o_ref[...] = jnp.maximum(y1, y2).astype(o_ref.dtype)


def _tiledk_kernel(x_ref, w1_ref, w2_ref, b1_ref, b2_ref, o_ref,
                   acc1_ref, acc2_ref, *, compute_dtype):
    """Tiled-K grid step: accumulate both halves in f32, finalize with max."""
    k = pl.program_id(2)

    @pl.when(k == 0)
    def _init():
        acc1_ref[...] = jnp.zeros_like(acc1_ref)
        acc2_ref[...] = jnp.zeros_like(acc2_ref)

    x = x_ref[...]
    w1 = w1_ref[...]
    w2 = w2_ref[...]
    if compute_dtype is not None:
        x = x.astype(compute_dtype)
        w1 = w1.astype(compute_dtype)
        w2 = w2.astype(compute_dtype)
    acc1_ref[...] += jnp.dot(x, w1, preferred_element_type=jnp.float32)
    acc2_ref[...] += jnp.dot(x, w2, preferred_element_type=jnp.float32)

    @pl.when(k == pl.num_programs(2) - 1)
    def _finalize():
        y1 = acc1_ref[...] + b1_ref[...].astype(jnp.float32)
        y2 = acc2_ref[...] + b2_ref[...].astype(jnp.float32)
        o_ref[...] = jnp.maximum(y1, y2).astype(o_ref.dtype)


# ---------------------------------------------------------------------------
# Tile planning
# ---------------------------------------------------------------------------
def _round_up(v, m):
    return (v + m - 1) // m * m


def _div_cands(dim, prefs):
    """Divisors of `dim` drawn from `prefs` (descending), always incl. dim."""
    out = [dim]
    for c in prefs:
        if c < dim and dim % c == 0:
            out.append(c)
    return out


def _vmem_budget():
    """Returns (tile budget bytes, vmem-limit headroom bytes, has 2 TCs)."""
    try:
        cap = int(pltpu.get_tpu_info().vmem_capacity_bytes)
    except Exception:  # conservative fallback if the query is unavailable
        cap = 64 * 2**20
    if cap <= 80 * 2**20:                   # v7x-class: 64 MiB/TC, 2 TCs/chip
        return 40 * 2**20, 8 * 2**20, True
    return 96 * 2**20, 16 * 2**20, False    # v5e/v6e: 128 MiB, 1 TC


def _select_tiles(B_p, d_in, sp_p, x_it, w_it, b_it, out_it, budget, two_cores,
                  tm=None, tn=None, tk=None):
    """Pick (tm, tn, tk, tiled_k, footprint_bytes) under the VMEM tile budget."""

    def footprint(tm_, tn_, tk_, acc):
        # Double-buffered inputs + double-buffered output (+ f32 accumulators).
        in_b = 2 * (tm_ * tk_ * x_it + 2 * tk_ * tn_ * w_it + 2 * tn_ * b_it)
        out_b = 2 * tm_ * tn_ * out_it
        acc_b = 2 * tm_ * tn_ * 4 if acc else 0
        return in_b + out_b + acc_b

    tn_cands = [tn] if tn is not None else _div_cands(
        sp_p, (2048, 1024, 512, 256, 128))
    tm_cands = [tm] if tm is not None else _div_cands(
        B_p, (1024, 512, 384, 256, 192, 128, 64, 32, 16, 8))
    if tk is not None:
        tk_cands = [tk]
    elif d_in % 128 == 0:
        tk_cands = _div_cands(d_in, (4096, 2048, 1024, 512, 256, 128))
    else:
        # TODO(synk): very large non-128-aligned d_in would need wrapper-side
        # K zero-padding to enable reduction tiling; full-K is used here.
        tk_cands = [d_in]

    def pick_tm(tn_, tk_, acc):
        fitting = [t for t in tm_cands if footprint(t, tn_, tk_, acc) <= budget]
        if not fitting:
            return None
        if two_cores:
            nb = sp_p // tn_
            # Keep both TensorCores busy: prefer an even (then any) >=2
            # parallel block count without dropping tm below 128 rows.
            for pred in (
                    lambda t: (B_p // t) * nb >= 2 and ((B_p // t) * nb) % 2 == 0,
                    lambda t: (B_p // t) * nb >= 2):
                good = [t for t in fitting if pred(t) and t >= min(128, B_p)]
                if good:
                    return good[0]          # largest such (lists are descending)
        return fitting[0]                   # largest fitting tile

    # 1) Single-K plan (no accumulator scratch, no K grid axis).
    if tk is None or tk == d_in:
        for tn_ in tn_cands:
            tm_ = pick_tm(tn_, d_in, acc=False)
            if tm_ is not None:
                return tm_, tn_, d_in, False, footprint(tm_, tn_, d_in, False)

    # 2) Tiled-K plan (f32 accumulators, K as trailing "arbitrary" axis).
    for tn_ in tn_cands:
        for tk_ in tk_cands:
            if tk_ == d_in and tk is None:
                continue        # already covered by the single-K attempt
            tm_ = pick_tm(tn_, tk_, acc=True)
            if tm_ is not None:
                return tm_, tn_, tk_, True, footprint(tm_, tn_, tk_, True)

    raise ValueError(
        f"no tile configuration fits the VMEM tile budget ({budget} bytes) "
        f"for B={B_p}, d_in={d_in}, sp={sp_p}")


# ---------------------------------------------------------------------------
# Wrapper
# ---------------------------------------------------------------------------
def linear_layer_elt_wise(x, weight, bias, *, out_dtype=None, compute_dtype=None,
                          tm=None, tn=None, tk=None):
    """Forward of LinearLayer(act='elt_wise', use_bn=False, dropout=None).

    x: [B, D_in]; weight: [D_out, D_in] (nn.Linear layout); bias: [D_out].
    Returns max(y[:, :D_out//2], y[:, D_out//2:]) with y = x @ W^T + b.
    """
    B, d_in = x.shape
    d_out, d_in_w = weight.shape
    assert d_in_w == d_in, "weight must be [D_out, D_in] (nn.Linear layout)"
    assert d_out % 2 == 0, "SliceMax requires an even output_dim"
    assert bias.shape == (d_out,)
    sp = d_out // 2
    out_dtype = jnp.dtype(out_dtype if out_dtype is not None else x.dtype)
    if tk is not None:
        assert d_in % tk == 0 and (tk == d_in or tk % 128 == 0)

    # ---- one-time wrapper-side layout prep (one HBM pass each) -------------
    # Transpose nn.Linear's [D_out, D_in] weight to [D_in, D_out] so the kernel
    # runs a plain NN matmul (no recurring per-tile transpose on the XLU), and
    # zero-pad each output half to a lane-dense multiple of 128 columns.
    # TODO(synk): cache wt/b1/b2 across calls when the weights are static.
    wt = weight.T                                    # [d_in, d_out]
    sp_p = _round_up(sp, 128)                        # lane-dense output halves
    B_p = _round_up(B, 8)                            # sublane-aligned batch
    if sp_p != sp:
        zpad = jnp.zeros((d_in, sp_p - sp), wt.dtype)
        wt = jnp.concatenate([wt[:, :sp], zpad, wt[:, sp:], zpad], axis=1)
        bz = jnp.zeros((sp_p - sp,), bias.dtype)
        b1 = jnp.concatenate([bias[:sp], bz]).reshape(1, sp_p)
        b2 = jnp.concatenate([bias[sp:], bz]).reshape(1, sp_p)
    else:
        b1 = bias[:sp].reshape(1, sp_p)
        b2 = bias[sp:].reshape(1, sp_p)
    if B_p != B:
        x = jnp.concatenate([x, jnp.zeros((B_p - B, d_in), x.dtype)], axis=0)

    # ---- tile plan under a per-generation VMEM budget -----------------------
    budget, headroom, two_cores = _vmem_budget()
    cd = jnp.dtype(compute_dtype) if compute_dtype is not None else None
    x_it = x.dtype.itemsize
    w_it = wt.dtype.itemsize
    b_it = b1.dtype.itemsize
    out_it = out_dtype.itemsize

    tm_, tn_, tk_, tiled_k, fp = _select_tiles(
        B_p, d_in, sp_p, x_it, w_it, b_it, out_it, budget, two_cores,
        tm=tm, tn=tn, tk=tk)
    nblk = sp_p // tn_           # block offset of the second half along D_out
    vmem_limit = int(max(32 * 2**20, fp + headroom))

    cost = pl.CostEstimate(
        flops=2 * B * d_in * d_out,
        transcendentals=0,
        bytes_accessed=(B * d_in * x_it + d_out * d_in * w_it
                        + d_out * b_it + B * sp * out_it),
    )

    if not tiled_k:
        # Single-K fast path: no accumulator scratch, no K axis, result goes
        # straight from the MXU epilogue to the lane-dense output tile.
        grid = (B_p // tm_, sp_p // tn_)
        kernel = functools.partial(_fullk_kernel, compute_dtype=cd)
        in_specs = [
            pl.BlockSpec((tm_, d_in), lambda i, j: (i, 0)),         # x
            pl.BlockSpec((d_in, tn_), lambda i, j: (0, j)),         # W^T cols [0, sp_p)
            pl.BlockSpec((d_in, tn_), lambda i, j: (0, j + nblk)),  # W^T cols [sp_p, 2*sp_p)
            pl.BlockSpec((1, tn_), lambda i, j: (0, j)),            # bias[:sp]
            pl.BlockSpec((1, tn_), lambda i, j: (0, j)),            # bias[sp:]
        ]
        out_specs = pl.BlockSpec((tm_, tn_), lambda i, j: (i, j))
        scratch_shapes = []
        dim_sem = ("parallel", "parallel")
    else:
        # Fallback: tiled reduction with f32 accumulators; K is the trailing
        # "arbitrary" axis, M/N stay "parallel".
        grid = (B_p // tm_, sp_p // tn_, d_in // tk_)
        kernel = functools.partial(_tiledk_kernel, compute_dtype=cd)
        in_specs = [
            pl.BlockSpec((tm_, tk_), lambda i, j, k: (i, k)),
            pl.BlockSpec((tk_, tn_), lambda i, j, k: (k, j)),
            pl.BlockSpec((tk_, tn_), lambda i, j, k: (k, j + nblk)),
            pl.BlockSpec((1, tn_), lambda i, j, k: (0, j)),
            pl.BlockSpec((1, tn_), lambda i, j, k: (0, j)),
        ]
        out_specs = pl.BlockSpec((tm_, tn_), lambda i, j, k: (i, j))
        scratch_shapes = [pltpu.VMEM((tm_, tn_), jnp.float32),
                          pltpu.VMEM((tm_, tn_), jnp.float32)]
        dim_sem = ("parallel", "parallel", "arbitrary")

    out_p = pl.pallas_call(
        kernel,
        out_shape=jax.ShapeDtypeStruct((B_p, sp_p), out_dtype),
        grid_spec=pltpu.PrefetchScalarGridSpec(
            num_scalar_prefetch=0,
            grid=grid,
            in_specs=in_specs,
            out_specs=out_specs,
            scratch_shapes=scratch_shapes,
        ),
        compiler_params=pltpu.CompilerParams(
            dimension_semantics=dim_sem,
            vmem_limit_bytes=vmem_limit,
        ),
        cost_estimate=cost,
    )(x, wt, wt, b1, b2)   # the SAME transposed weight buffer feeds both halves

    return out_p[:B, :sp]


# ---------------------------------------------------------------------------
# Reference + self-test
# ---------------------------------------------------------------------------
def _reference(x, weight, bias):
    y = x @ weight.T + bias
    sp = weight.shape[0] // 2
    return jnp.maximum(y[:, :sp], y[:, sp:])


def _run_case(key, batch, input_dim, output_dim, **kernel_kwargs):
    k_x, k_w, k_b = jax.random.split(key, 3)
    bound = 1.0 / jnp.sqrt(jnp.float32(input_dim))
    weight = jax.random.uniform(k_w, (output_dim, input_dim), jnp.float32,
                                minval=-bound, maxval=bound)
    bias = jax.random.uniform(k_b, (output_dim,), jnp.float32,
                              minval=-bound, maxval=bound)
    x = jax.random.normal(k_x, (batch, input_dim), jnp.float32)

    out = jax.block_until_ready(
        linear_layer_elt_wise(x, weight, bias, **kernel_kwargs))
    ref = _reference(x, weight, bias)
    assert out.shape == (batch, output_dim // 2)
    max_err = float(jnp.max(jnp.abs(out - ref)))
    assert jnp.allclose(out, ref, atol=1e-2, rtol=1e-2), max_err


if __name__ == "__main__":
    key = jax.random.PRNGKey(0)
    k1, k2, k3 = jax.random.split(key, 3)
    # Small shape consistent with the module (2-D [batch, input_dim] input);
    # exercises the sp < 128 lane-padding path and the single-K fast path.
    _run_case(k1, batch=8, input_dim=32, output_dim=64)
    # Larger tile-aligned shape: single-K fast path with big lane-dense tiles.
    _run_case(k2, batch=384, input_dim=1024, output_dim=256)
    # Force the tiled-K accumulator fallback (explicit tk) for coverage.
    _run_case(k3, batch=384, input_dim=1024, output_dim=256, tk=256)
    # TODO(synk): nn.Dropout (train-mode RNG masking) and BatchNorm1d are not
    # implemented; the module defaults dropout=None / use_bn=False (identity
    # paths) are what is reproduced here.
    print("KERNEL_OK")
</pallas_src>

<mosaic_0001>
module attributes {stable_mosaic.version = 11 : i64} {
  func.func @_fullk_kernel(%arg0: i32, %arg1: i32, %arg2: memref<8x32xf32, #tpu.memory_space<vmem>>, %arg3: memref<32x128xf32, #tpu.memory_space<vmem>>, %arg4: memref<32x128xf32, #tpu.memory_space<vmem>>, %arg5: memref<1x128xf32, #tpu.memory_space<vmem>>, %arg6: memref<1x128xf32, #tpu.memory_space<vmem>>, %arg7: memref<8x128xf32, #tpu.memory_space<vmem>>) attributes {dimension_semantics = [#tpu.dimension_semantics<parallel>, #tpu.dimension_semantics<parallel>], iteration_bounds = array<i64: 1, 1>, scalar_prefetch = 0 : i64, scratch_operands = 0 : i64, tpu.core_type = #tpu.core_type<tc>, window_params = [{transform_indices = @transform_0, window_bounds = array<i64: 8, 32>}, {transform_indices = @transform_1, window_bounds = array<i64: 32, 128>}, {transform_indices = @transform_2, window_bounds = array<i64: 32, 128>}, {transform_indices = @transform_3, window_bounds = array<i64: 1, 128>}, {transform_indices = @transform_4, window_bounds = array<i64: 1, 128>}, {transform_indices = @transform_5, window_bounds = array<i64: 8, 128>}]} {
    %c0 = arith.constant 0 : index
    %c0_0 = arith.constant 0 : index
    %0 = vector.load %arg2[%c0, %c0_0] : memref<8x32xf32, #tpu.memory_space<vmem>>, vector<8x32xf32>
    %c0_1 = arith.constant 0 : index
    %c0_2 = arith.constant 0 : index
    %1 = vector.load %arg3[%c0_1, %c0_2] : memref<32x128xf32, #tpu.memory_space<vmem>>, vector<32x128xf32>
    %c0_3 = arith.constant 0 : index
    %c0_4 = arith.constant 0 : index
    %2 = vector.load %arg4[%c0_3, %c0_4] : memref<32x128xf32, #tpu.memory_space<vmem>>, vector<32x128xf32>
    %cst = arith.constant dense<0.000000e+00> : vector<8x128xf32>
    %3 = tpu.matmul %0, %1, %cst {dimension_numbers = #tpu.dot_dimension_numbers<[1], [0], [0], [1], [0, 0, 1, 1], [], []>} : vector<8x32xf32>, vector<32x128xf32>, vector<8x128xf32> -> vector<8x128xf32>
    %cst_5 = arith.constant dense<0.000000e+00> : vector<8x128xf32>
    %4 = tpu.matmul %0, %2, %cst_5 {dimension_numbers = #tpu.dot_dimension_numbers<[1], [0], [0], [1], [0, 0, 1, 1], [], []>} : vector<8x32xf32>, vector<32x128xf32>, vector<8x128xf32> -> vector<8x128xf32>
    %c0_6 = arith.constant 0 : index
    %c0_7 = arith.constant 0 : index
    %5 = vector.load %arg5[%c0_6, %c0_7] : memref<1x128xf32, #tpu.memory_space<vmem>>, vector<1x128xf32>
    %6 = vector.broadcast %5 : vector<1x128xf32> to vector<8x128xf32>
    %7 = arith.addf %3, %6 : vector<8x128xf32>
    %c0_8 = arith.constant 0 : index
    %c0_9 = arith.constant 0 : index
    %8 = vector.load %arg6[%c0_8, %c0_9] : memref<1x128xf32, #tpu.memory_space<vmem>>, vector<1x128xf32>
    %9 = vector.broadcast %8 : vector<1x128xf32> to vector<8x128xf32>
    %10 = arith.addf %4, %9 : vector<8x128xf32>
    %11 = arith.maximumf %7, %10 : vector<8x128xf32>
    %c0_10 = arith.constant 0 : index
    %c0_11 = arith.constant 0 : index
    %12 = vector.load %arg7[%c0_10, %c0_11] : memref<8x128xf32, #tpu.memory_space<vmem>>, vector<8x128xf32>
    tpu.vector_store %arg7[%c0_10, %c0_11], %11 {strides = array<i32>} : memref<8x128xf32, #tpu.memory_space<vmem>>, vector<8x128xf32>,
    return
  }
  func.func @transform_0(%arg0: i32, %arg1: i32) -> (i32, i32) {
    %c0_i32 = arith.constant 0 : i32
    %c0_i32_0 = arith.constant 0 : i32
    return %arg0, %c0_i32 : i32, i32
  }
  func.func @transform_1(%arg0: i32, %arg1: i32) -> (i32, i32) {
    %c0_i32 = arith.constant 0 : i32
    %c0_i32_0 = arith.constant 0 : i32
    return %c0_i32, %arg1 : i32, i32
  }
  func.func @transform_2(%arg0: i32, %arg1: i32) -> (i32, i32) {
    %c1_i32 = arith.constant 1 : i32
    %0 = arith.addi %arg1, %c1_i32 : i32
    %c0_i32 = arith.constant 0 : i32
    %c0_i32_0 = arith.constant 0 : i32
    return %c0_i32, %0 : i32, i32
  }
  func.func @transform_3(%arg0: i32, %arg1: i32) -> (i32, i32) {
    %c0_i32 = arith.constant 0 : i32
    %c0_i32_0 = arith.constant 0 : i32
    return %c0_i32, %arg1 : i32, i32
  }
  func.func @transform_4(%arg0: i32, %arg1: i32) -> (i32, i32) {
    %c0_i32 = arith.constant 0 : i32
    %c0_i32_0 = arith.constant 0 : i32
    return %c0_i32, %arg1 : i32, i32
  }
  func.func @transform_5(%arg0: i32, %arg1: i32) -> (i32, i32) {
    %c0_i32 = arith.constant 0 : i32
    return %arg0, %arg1 : i32, i32
  }
}

</mosaic_0001>

<llo_original>
// kernel: tpu_custom_call.1
$region0: #{tpu_custom_call.1}
  #allocation0 [shape = 'u32[]', space=smem, size = 0x4, offset = 0x4, fixed_abs, tag = 'smem constant byte address 0x4 - core index']
  #allocation1 [shape = 'u32[72,128]{1,0:T(1,128)}', space=vmem, size = 0x9000, scoped, tag = 'internal scratch']
  %s0 = inlined_call_operand.hbm [shape: f32[8,32], index: 0, kind: input, shape index: {}]
  %s1 = inlined_call_operand.hbm [shape: f32[32,256], index: 1, kind: input, shape index: {}]
  %s2 = inlined_call_operand.hbm [shape: f32[32,256], index: 2, kind: input, shape index: {}]
  %s3 = inlined_call_operand.vmem [shape: f32[1,128], index: 3, kind: input, shape index: {}]
  %s4 = inlined_call_operand.vmem [shape: f32[1,128], index: 4, kind: input, shape index: {}]
  %s5 = inlined_call_operand.hbm [shape: f32[8,128], index: 5, kind: output, shape index: {}]
  %s6 = sld [smem:[#allocation0]]
  $region42: #{tpu_custom_call.1} parent=0
    _
  %s8 = ssub.s32 1, %s6
  %s9 = scalar_select 0, %s8, %s6
  $region1: #{tpu_custom_call.1} parent=0
    #allocation2 [shape = 'u8[4096]{0}', space=vmem, size = 0x1000, scoped, tag = 'input window, operand 0, single buffered']
    #allocation3 [shape = 's32[1]{0}', space=sflag, size = 0x4, scoped, tag = 'scoped memory for tpu_custom_call.1']
    #allocation4 [shape = 's32[1]{0}', space=sflag, size = 0x4, scoped, tag = 'scoped memory for tpu_custom_call.1']
    #allocation5 [shape = 'u8[16384]{0}', space=vmem, size = 0x4000, scoped, tag = 'input window, operand 1, single buffered']
    #allocation6 [shape = 's32[1]{0}', space=sflag, size = 0x4, scoped, tag = 'scoped memory for tpu_custom_call.1']
    #allocation7 [shape = 'u8[16384]{0}', space=vmem, size = 0x4000, scoped, tag = 'input window, operand 2, single buffered']
    #allocation8 [shape = 'u8[4096]{0}', space=vmem, size = 0x1000, scoped, tag = 'output window, operand 0, single buffered']
    %10 = vsyncpa [#allocation3], 0
    %11 = vsyncpa [#allocation6], 0
    %12 = vsyncpa [#allocation4], 0
    // Predicated region
    $region2: #{tpu_custom_call.1} parent=1 // pred_check
      _
    $region3: #{tpu_custom_call.1} parent=1 // pred_check_branch
      %14 = sbr.rel (0) target = $region5
    $region4: #{tpu_custom_call.1} parent=1 // pred_region
      %16 = vsyncadd [#allocation3], 0
      %s18 = sshll.u32 %s0, 4
      %s19 = int_to_ptr.hbm [resolvable:$true] %s18
      %s20 = sshll.u32 [#allocation2], 4
      %s21 = int_to_ptr.vmem [resolvable:$true] %s20
      %23 = dma.hbm_to_vmem [thread:$0]  %s19, 128, %s21, [#allocation3]
    $region5: #{tpu_custom_call.1} parent=1 // pred_fallthru
      _
    // Predicated region
    $region6: #{tpu_custom_call.1} parent=1 // pred_check
      _
    $region7: #{tpu_custom_call.1} parent=1 // pred_check_branch
      %25 = sbr.rel (0) target = $region9
    $region8: #{tpu_custom_call.1} parent=1 // pred_region
      %27 = vsyncadd [#allocation6], 0
      %s28 = sshll.u32 %s1, 4
      %s29 = int_to_ptr.hbm [resolvable:$true] %s28
      %s30 = sshll.u32 [#allocation5], 4
      %s31 = int_to_ptr.vmem [resolvable:$true] %s30
      %36 = dma.hbm_to_vmem [thread:$0]  %s29, 512, %s31, [#allocation6], 256, 128, 8
    $region9: #{tpu_custom_call.1} parent=1 // pred_fallthru
      _
    // Predicated region
    $region10: #{tpu_custom_call.1} parent=1 // pred_check
      _
    $region11: #{tpu_custom_call.1} parent=1 // pred_check_branch
      %38 = sbr.rel (0) target = $region13
    $region12: #{tpu_custom_call.1} parent=1 // pred_region
      %s39 = sadd.s32 0, 1
      %41 = vsyncadd [#allocation6], 0
      %s42 = smul.addr %s39, 8
      %s43 = scalar_lea.hbm %s2, %s42
      %s44 = sshll.u32 %s43, 4
      %s45 = int_to_ptr.hbm [resolvable:$true] %s44
      %s46 = sshll.u32 [#allocation7], 4
      %s47 = int_to_ptr.vmem [resolvable:$true] %s46
      %52 = dma.hbm_to_vmem [thread:$0]  %s45, 512, %s47, [#allocation6], 256, 128, 8
    $region13: #{tpu_custom_call.1} parent=1 // pred_fallthru
      _
    // Predicated region
    $region14: #{tpu_custom_call.1} parent=1 // pred_check
      _
    $region15: #{tpu_custom_call.1} parent=1 // pred_check_branch
      %54 = sbr.rel (0) target = $region17
    $region16: #{tpu_custom_call.1} parent=1 // pred_region
      _
    $region17: #{tpu_custom_call.1} parent=1 // pred_fallthru
      _
    // Predicated region
    $region18: #{tpu_custom_call.1} parent=1 // pred_check
      _
    $region19: #{tpu_custom_call.1} parent=1 // pred_check_branch
      %56 = sbr.rel (0) target = $region21
    $region20: #{tpu_custom_call.1} parent=1 // pred_region
      _
    $region21: #{tpu_custom_call.1} parent=1 // pred_fallthru
      _
    // Predicated region
    $region22: #{tpu_custom_call.1} parent=1 // pred_check
      _
    $region23: #{tpu_custom_call.1} parent=1 // pred_check_branch
      %58 = sbr.rel (0) target = $region25
    $region24: #{tpu_custom_call.1} parent=1 // pred_region
      %60 = dma.done [#allocation3], 128
    $region25: #{tpu_custom_call.1} parent=1 // pred_fallthru
      _
    // Predicated region
    $region26: #{tpu_custom_call.1} parent=1 // pred_check
      _
    $region27: #{tpu_custom_call.1} parent=1 // pred_check_branch
      %62 = sbr.rel (0) target = $region29
    $region28: #{tpu_custom_call.1} parent=1 // pred_region
      %64 = dma.done [#allocation6], 512
    $region29: #{tpu_custom_call.1} parent=1 // pred_fallthru
      _
    // Predicated region
    $region30: #{tpu_custom_call.1} parent=1 // pred_check
      _
    $region31: #{tpu_custom_call.1} parent=1 // pred_check_branch
      %66 = sbr.rel (0) target = $region33
    $region32: #{tpu_custom_call.1} parent=1 // pred_region
      %68 = dma.done [#allocation6], 512
    $region33: #{tpu_custom_call.1} parent=1 // pred_fallthru
      _
    %s69 = sadd.s32 0, 1
    %v70 = vld [vmem:[#allocation2] sm:$0xff]
    %v71 = vld [vmem:[#allocation5] sm:$0xff]
    %v72 = vld [vmem:[#allocation5 + $0x8] sm:$0xff]
    %v73 = vld [vmem:[#allocation5 + $0x10] sm:$0xff]
    %v74 = vld [vmem:[#allocation5 + $0x18] sm:$0xff]
    %v75 = vld [vmem:[#allocation7] sm:$0xff]
    %v76 = vld [vmem:[#allocation7 + $0x8] sm:$0xff]
    %v77 = vld [vmem:[#allocation7 + $0x10] sm:$0xff]
    %v78 = vld [vmem:[#allocation7 + $0x18] sm:$0xff]
    %v79 = vld [vmem:[%s3] sm:$0x1]
    %v81 = vperm.slane %v79, 0
    %vm83 = vcmask 261120
    %v85 = vsel %vm83, %v70, 0
    %87 = vmatpush.msra.mxu0 0.0
    %88 = vmatpush.msra.mxu0 0.0
    %89 = vmatpush.msra.mxu0 0.0
    %90 = vmatpush.msra.mxu0 0.0
    %91 = vmatpush.msra.mxu0 0.0
    %92 = vmatpush.msra.mxu0 0.0
    %93 = vmatpush.msra.mxu0 0.0
    %94 = vmatpush.msra.mxu0 0.0
    %95 = vmatpush.msra.mxu0 0.0
    %96 = vmatpush.msra.mxu0 0.0
    %97 = vmatpush.msra.mxu0 0.0
    %98 = vmatpush.msra.mxu0 0.0
    %99 = vmatpush.msra.mxu0 %v74
    %100 = vmatpush.msra.mxu0 %v73
    %101 = vmatpush.msra.mxu0 %v72
    %102 = vmatpush.msra.mxu0 %v71
    %103 = vmatmul.f32.gmra.mxu0 %v85
    %v104 = vpop.f32.mrf.mxu0
    %v105 = vadd.f32 %v81, %v104
    %106 = vdwg.mxu0
    %v107 = vld [vmem:[%s4] sm:$0x1]
    %v109 = vperm.slane %v107, 0
    %111 = vmatpush.msra.mxu0 0.0
    %112 = vmatpush.msra.mxu0 0.0
    %113 = vmatpush.msra.mxu0 0.0
    %114 = vmatpush.msra.mxu0 0.0
    %115 = vmatpush.msra.mxu0 0.0
    %116 = vmatpush.msra.mxu0 0.0
    %117 = vmatpush.msra.mxu0 0.0
    %118 = vmatpush.msra.mxu0 0.0
    %119 = vmatpush.msra.mxu0 0.0
    %120 = vmatpush.msra.mxu0 0.0
    %121 = vmatpush.msra.mxu0 0.0
    %122 = vmatpush.msra.mxu0 0.0
    %123 = vmatpush.msra.mxu0 %v78
    %124 = vmatpush.msra.mxu0 %v77
    %125 = vmatpush.msra.mxu0 %v76
    %126 = vmatpush.msra.mxu0 %v75
    %127 = vmatmul.f32.gmra.mxu0 %v85
    %v128 = vpop.f32.mrf.mxu0
    %v129 = vadd.f32 %v109, %v128
    %130 = vdwg.mxu0
    %v131 = vmax.f32 %v105, %v129
    %132 = vst [vmem:[#allocation8] sm:$0xff] %v131
    // Predicated region
    $region34: #{tpu_custom_call.1} parent=1 // pred_check
      _
    $region35: #{tpu_custom_call.1} parent=1 // pred_check_branch
      %134 = sbr.rel (0) target = $region37
    $region36: #{tpu_custom_call.1} parent=1 // pred_region
      %136 = vsyncadd [#allocation4], 0
      %s138 = sshll.u32 [#allocation8], 4
      %s139 = int_to_ptr.vmem [resolvable:$true] %s138
      %s140 = sshll.u32 %s5, 4
      %s141 = int_to_ptr.hbm [resolvable:$true] %s140
      %143 = dma.vmem_to_hbm [thread:$0]  %s139, 128, %s141, [#allocation4]
    $region37: #{tpu_custom_call.1} parent=1 // pred_fallthru
      _
    // Predicated region
    $region38: #{tpu_custom_call.1} parent=1 // pred_check
      _
    $region39: #{tpu_custom_call.1} parent=1 // pred_check_branch
      %145 = sbr.rel (0) target = $region41
    $region40: #{tpu_custom_call.1} parent=1 // pred_region
      %147 = dma.done [#allocation4], 128
    $region41: #{tpu_custom_call.1} parent=1 // pred_fallthru
      _
    %148 = vsyncpa [#allocation3], 1
    %149 = vsyncpa [#allocation6], 1
    %150 = vsyncpa [#allocation4], 1

</llo_original>
